<compile_context>
chip_gen: v7x
topology: tpu7x:2x2x1
jax: 0.10.0
libtpu: 0.0.40
codegen_flags: <defaults>
</compile_context>

<pallas_src>
import functools

import jax
import jax.numpy as jnp
from jax.experimental import pallas as pl
from jax.experimental.pallas import tpu as pltpu


_VMEM_LIMIT_BYTES = 32 * 1024 * 1024      # explicit; <= physical VMEM on all gens
_VMEM_TILE_BUDGET = 16 * 1024 * 1024      # headroom under the limit


def _maxpool2d_kernel(x_ref, o_ref, *, k, s, h_out, w_out):
    """x_ref: (H, W, T) block; o_ref: (h_out, w_out, T) block. k x k window, stride s."""

    @pl.loop(0, h_out)
    def _(oh):
        row0 = oh * s
        acc = None
        for kw in range(k):  # static, tiny (k) unrolled loop
            # Rows row0 .. row0+k-1 (contiguous, dynamic start on a major dim),
            # cols kw, kw+s, ... (strided along the sublane dim), all lanes.
            # Shape: (k, w_out, T).
            win = x_ref[pl.ds(row0, k), pl.ds(kw, w_out, s), :]
            m = jnp.max(win, axis=0)           # reduce over kh -> (w_out, T)
            acc = m if acc is None else jnp.maximum(acc, m)
        o_ref[oh] = acc.astype(o_ref.dtype)    # one lane-dense output row slab


def _pick_lane_tile(bc, h, w, h_out, w_out, itemsize, budget=_VMEM_TILE_BUDGET):
    """Largest 128-aligned lane tile that (a) fits the VMEM budget with
    double-buffered in/out blocks and (b) leaves >= 2 grid steps when possible
    so the pipeline / second TensorCore (v7x) both get work."""
    if bc < 128:
        # Full dim: block_shape == array dim is exempt from the 128-lane rule.
        return bc
    per_lane = (h * w + h_out * w_out) * itemsize * 2   # double-buffered in + out
    t_vmem = max(128, (budget // max(per_lane, 1)) // 128 * 128)
    t_split = max(128, (bc // 2) // 128 * 128) if bc >= 256 else 128
    return min(1024, t_vmem, t_split)


def max_pool_block(x, kernel_size, stride=None):
    """Forward pass of MaxPoolBlock on NCHW input."""
    if stride is None:
        stride = kernel_size
    k = int(kernel_size)
    s = int(stride)
    b, c, h, w = x.shape
    h_out = (h - k) // s + 1
    w_out = (w - k) // s + 1
    assert h_out >= 1 and w_out >= 1, "pooling window larger than input"
    bc = b * c

    # Layout plumbing (outside the kernel): batch*channel -> lanes.
    xt = jnp.transpose(x, (2, 3, 0, 1)).reshape(h, w, bc)

    t_bc = _pick_lane_tile(bc, h, w, h_out, w_out, xt.dtype.itemsize)
    grid = (pl.cdiv(bc, t_bc),)

    kernel = functools.partial(
        _maxpool2d_kernel, k=k, s=s, h_out=h_out, w_out=w_out)

    out = pl.pallas_call(
        kernel,
        out_shape=jax.ShapeDtypeStruct((h_out, w_out, bc), x.dtype),
        grid_spec=pltpu.PrefetchScalarGridSpec(
            num_scalar_prefetch=0,
            grid=grid,
            # Full spatial plane per step; tile only the lane (B*C) axis.
            # Note: for very large H*W an H-tiled variant with a (k-s)-row
            # halo would be needed to keep the block inside the VMEM budget.
            in_specs=[pl.BlockSpec((h, w, t_bc), lambda i: (0, 0, i))],
            out_specs=pl.BlockSpec((h_out, w_out, t_bc), lambda i: (0, 0, i)),
        ),
        compiler_params=pltpu.CompilerParams(
            dimension_semantics=("parallel",),
            vmem_limit_bytes=_VMEM_LIMIT_BYTES,
        ),
    )(xt)

    # (H_out, W_out, B*C) -> (B, C, H_out, W_out)
    return jnp.transpose(out.reshape(h_out, w_out, b, c), (2, 3, 0, 1))


def _reference(x, k, s):
    return jax.lax.reduce_window(
        x, -jnp.inf, jax.lax.max,
        window_dimensions=(1, 1, k, k),
        window_strides=(1, 1, s, s),
        padding="VALID")


if __name__ == "__main__":
    key = jax.random.PRNGKey(0)

    configs = [
        # (x_shape, kernel_size, stride)
        ((2, 4, 16, 16), 2, 2),     # toy shape from the module spec
        ((2, 4, 16, 16), 3, 2),     # overlapping windows, stride != kernel_size
        ((4, 128, 16, 16), 2, 2),   # lane-dense path: B*C = 512 -> 2 grid steps
    ]

    for idx, (shape, ksz, st) in enumerate(configs):
        kk = jax.random.fold_in(key, idx)
        x = jax.random.normal(kk, shape, dtype=jnp.float32)

        out = max_pool_block(x, kernel_size=ksz, stride=st)
        out = jax.block_until_ready(out)

        ref = _reference(x, ksz, st)
        assert out.shape == ref.shape, (out.shape, ref.shape)
        assert jnp.allclose(out, ref), (
            f"mismatch vs reference for shape={shape}, k={ksz}, s={st}")

    print("KERNEL_OK")
</pallas_src>

<mosaic_0001>
module attributes {stable_mosaic.version = 11 : i64} {
  func.func @_maxpool2d_kernel(%arg0: i32, %arg1: memref<16x16x8xf32, #tpu.memory_space<vmem>>, %arg2: memref<8x8x8xf32, #tpu.memory_space<vmem>>) attributes {dimension_semantics = [#tpu.dimension_semantics<parallel>], iteration_bounds = array<i64: 1>, scalar_prefetch = 0 : i64, scratch_operands = 0 : i64, tpu.core_type = #tpu.core_type<tc>, window_params = [{transform_indices = @transform_0, window_bounds = array<i64: 16, 16, 8>}, {transform_indices = @transform_1, window_bounds = array<i64: 8, 8, 8>}]} {
    %c0_i32 = arith.constant 0 : i32
    %c8_i32 = arith.constant 8 : i32
    %0 = arith.addi %c0_i32, %c8_i32 : i32
    %c1_i32 = arith.constant 1 : i32
    scf.for %arg3 = %c0_i32 to %0 step %c1_i32  : i32 {
      %c1_i32_1 = arith.constant 1 : i32
      %1 = arith.muli %arg3, %c1_i32_1 : i32
      %c0_i32_2 = arith.constant 0 : i32
      %2 = arith.addi %c0_i32_2, %1 : i32
      %c2_i32 = arith.constant 2 : i32
      %3 = arith.muli %2, %c2_i32 : i32
      %4 = arith.index_cast %3 : i32 to index
      %c0 = arith.constant 0 : index
      %c0_3 = arith.constant 0 : index
      %5 = tpu.strided_load %arg1[%4, %c0, %c0_3] {strides = array<i32: 1, 2, 1>} : memref<16x16x8xf32, #tpu.memory_space<vmem>>, vector<2x8x8xf32>
      %cst = arith.constant dense<0xFF800000> : vector<8x8xf32>
      %6 = vector.multi_reduction <maximumf>, %5, %cst [0] : vector<2x8x8xf32> to vector<8x8xf32>
      %7 = arith.index_cast %3 : i32 to index
      %c1 = arith.constant 1 : index
      %c0_4 = arith.constant 0 : index
      %8 = tpu.strided_load %arg1[%7, %c1, %c0_4] {strides = array<i32: 1, 2, 1>} : memref<16x16x8xf32, #tpu.memory_space<vmem>>, vector<2x8x8xf32>
      %cst_5 = arith.constant dense<0xFF800000> : vector<8x8xf32>
      %9 = vector.multi_reduction <maximumf>, %8, %cst_5 [0] : vector<2x8x8xf32> to vector<8x8xf32>
      %10 = arith.maximumf %6, %9 : vector<8x8xf32>
      %11 = arith.index_cast %2 : i32 to index
      %c0_6 = arith.constant 0 : index
      %c0_7 = arith.constant 0 : index
      %12 = vector.load %arg2[%11, %c0_6, %c0_7] : memref<8x8x8xf32, #tpu.memory_space<vmem>>, vector<1x8x8xf32>
      %13 = vector.shape_cast %12 : vector<1x8x8xf32> to vector<8x8xf32>
      %14 = vector.shape_cast %10 : vector<8x8xf32> to vector<1x8x8xf32>
      tpu.vector_store %arg2[%11, %c0_6, %c0_7], %14 {strides = array<i32>} : memref<8x8x8xf32, #tpu.memory_space<vmem>>, vector<1x8x8xf32>,
    }
    %c8_i32_0 = arith.constant 8 : i32
    return
  }
  func.func @transform_0(%arg0: i32) -> (i32, i32, i32) {
    %c0_i32 = arith.constant 0 : i32
    %c0_i32_0 = arith.constant 0 : i32
    %c0_i32_1 = arith.constant 0 : i32
    return %c0_i32, %c0_i32_0, %arg0 : i32, i32, i32
  }
  func.func @transform_1(%arg0: i32) -> (i32, i32, i32) {
    %c0_i32 = arith.constant 0 : i32
    %c0_i32_0 = arith.constant 0 : i32
    %c0_i32_1 = arith.constant 0 : i32
    return %c0_i32, %c0_i32_0, %arg0 : i32, i32, i32
  }
}

</mosaic_0001>

<llo_original>
// kernel: tpu_custom_call.1
$region0: #{tpu_custom_call.1}
  #allocation0 [shape = 'u32[]', space=smem, size = 0x4, offset = 0x4, fixed_abs, tag = 'smem constant byte address 0x4 - core index']
  #allocation1 [shape = 'u32[144,128]{1,0:T(1,128)}', space=vmem, size = 0x12000, scoped, tag = 'internal scratch']
  %s0 = inlined_call_operand.vmem [shape: f32[16,16,8], index: 0, kind: input, shape index: {}]
  %s1 = inlined_call_operand.hbm [shape: f32[8,8,8], index: 1, kind: output, shape index: {}]
  %s2 = sld [smem:[#allocation0]]
  $region21: #{tpu_custom_call.1} parent=0
    _
  %s4 = ssub.s32 1, %s2
  %s5 = scalar_select 0, %s4, %s2
  $region1: #{tpu_custom_call.1} parent=0
    #allocation2 [shape = 'u8[32768]{0}', space=vmem, size = 0x8000, scoped, tag = 'output window, operand 0, single buffered']
    #allocation3 [shape = 's32[1]{0}', space=sflag, size = 0x4, scoped, tag = 'scoped memory for tpu_custom_call.1']
    %6 = vsyncpa [#allocation3], 0
    // Predicated region
    $region2: #{tpu_custom_call.1} parent=1 // pred_check
      _
    $region3: #{tpu_custom_call.1} parent=1 // pred_check_branch
      %8 = sbr.rel (0) target = $region5
    $region4: #{tpu_custom_call.1} parent=1 // pred_region
      _
    $region5: #{tpu_custom_call.1} parent=1 // pred_fallthru
      _
    loop: start=0, step=1, limit=8
    $region6: #{tpu_custom_call.1} parent=1 // loop_pre_header
      _
    $region7: #{tpu_custom_call.1} parent=1 // loop_header
      %s10 = sphi 0, %s14
      %p11 = scmp.ge.s32.totalorder %s10, 8
    $region8: #{tpu_custom_call.1} parent=1 // loop_header_branch
      %13 = sbr.rel (%p11) target = $region12
    $region9: #{tpu_custom_call.1} parent=1 // loop_body
      %s15 = smul.u32 %s10, 2
      %s16 = smul.u32 %s15, 16
      %s17 = scalar_lea.vmem %s0, %s16
      %v18 = vld [vmem:[%s17] ss:$2 sm:$0xff]
      %s19 = scalar_lea.vmem %s17, 16
      %v20 = vld [vmem:[%s19] ss:$2 sm:$0xff]
      %vm21 = vcmask 64512
      %v22 = vsel %vm21, %v18, -inf
      %v23 = vsel %vm21, %v20, -inf
      %v24 = vmax.f32 %v22, %v23
      %s25 = scalar_lea.vmem %s17, 1
      %v26 = vld [vmem:[%s25] ss:$2 sm:$0xff]
      %s27 = scalar_lea.vmem %s17, 17
      %v28 = vld [vmem:[%s27] ss:$2 sm:$0xff]
      %v29 = vsel %vm21, %v26, -inf
      %v30 = vsel %vm21, %v28, -inf
      %v31 = vmax.f32 %v29, %v30
      %v32 = vmax.f32 %v24, %v31
      %s33 = smul.u32 %s10, 8
      %s34 = scalar_lea.vmem [#allocation2], %s33
      %35 = vst.msk [vmem:[%s34] sm:$0xff] %vm21, %v32
    $region10: #{tpu_custom_call.1} parent=1 // loop_footer
      %s14 = sadd.s32 1, %s10
    $region11: #{tpu_custom_call.1} parent=1 // loop_footer_branch
      %9 = sbr.rel target = $region7
    $region12: #{tpu_custom_call.1} parent=1 // loop_exit
      _
    // Predicated region
    $region13: #{tpu_custom_call.1} parent=1 // pred_check
      _
    $region14: #{tpu_custom_call.1} parent=1 // pred_check_branch
      %37 = sbr.rel (0) target = $region16
    $region15: #{tpu_custom_call.1} parent=1 // pred_region
      %s39 = ssub.s32 1024, 1024
      %40 = vsyncadd [#allocation3], %s39
      %s41 = sshll.u32 [#allocation2], 4
      %s42 = int_to_ptr.vmem [resolvable:$true] %s41
      %47 = dma.vmem_to_hbm [thread:$0]  %s42, 1024, %s1, [#allocation3], 128, 128, 8
    $region16: #{tpu_custom_call.1} parent=1 // pred_fallthru
      _
    // Predicated region
    $region17: #{tpu_custom_call.1} parent=1 // pred_check
      _
    $region18: #{tpu_custom_call.1} parent=1 // pred_check_branch
      %49 = sbr.rel (0) target = $region20
    $region19: #{tpu_custom_call.1} parent=1 // pred_region
      %50 = dma.done [#allocation3], 1024
    $region20: #{tpu_custom_call.1} parent=1 // pred_fallthru
      _
    %51 = vsyncpa [#allocation3], 1

</llo_original>
